<compile_context>
chip_gen: v7x
topology: tpu7x:2x2x1
jax: 0.10.0
libtpu: 0.0.40
codegen_flags: <defaults>
</compile_context>

<pallas_src>
import functools

import jax
import jax.numpy as jnp
from jax.experimental import pallas as pl
from jax.experimental.pallas import tpu as pltpu


def _round_up(x, m):
    return ((x + m - 1) // m) * m


def _pick_tile(dim, max_tile, granule):
    """Largest multiple of `granule` <= min(max_tile, dim) that divides `dim`.
    `dim` must already be a multiple of `granule`."""
    t = min(max_tile, dim)
    t = max((t // granule) * granule, granule)
    while dim % t:
        t -= granule
    return t


_VMEM_LIMIT = None


def _vmem_limit_bytes():
    """Generation-aware scoped VMEM limit (~75% of physical, capped)."""
    global _VMEM_LIMIT
    if _VMEM_LIMIT is None:
        try:
            cap = int(pltpu.get_tpu_info().vmem_capacity_bytes)
        except Exception:
            cap = 64 * 1024 * 1024  # conservative (v7x-sized) fallback
        _VMEM_LIMIT = min(cap * 3 // 4, 100 * 1024 * 1024)
    return _VMEM_LIMIT


# ---------------------------------------------------------------------------
# Tiled matmul with optional fused affine (+ ReLU) epilogue:
#   out = maybe_relu((a @ b) [* scale] [+ shift]);  scale/shift broadcast rows.
# All operands are already padded to tile multiples; accumulation is f32.
# ---------------------------------------------------------------------------
def _make_mm_kernel(has_scale, has_shift, relu, acc_in_out):
    def kernel(*refs):
        i = 0
        a_ref = refs[i]; i += 1
        b_ref = refs[i]; i += 1
        scale_ref = None
        shift_ref = None
        if has_scale:
            scale_ref = refs[i]; i += 1
        if has_shift:
            shift_ref = refs[i]; i += 1
        o_ref = refs[i]; i += 1
        acc_ref = o_ref if acc_in_out else refs[i]

        k = pl.program_id(2)
        prod = jnp.dot(a_ref[...], b_ref[...],
                       preferred_element_type=jnp.float32)

        @pl.when(k == 0)
        def _init():
            acc_ref[...] = prod

        @pl.when(k > 0)
        def _accumulate():
            acc_ref[...] += prod

        need_epilogue = has_scale or has_shift or relu or (not acc_in_out)
        if need_epilogue:
            @pl.when(k == pl.num_programs(2) - 1)
            def _finalize():
                y = acc_ref[...]
                if scale_ref is not None:
                    y = y * scale_ref[...]
                if shift_ref is not None:
                    y = y + shift_ref[...]
                if relu:
                    y = jnp.maximum(y, 0.0)
                o_ref[...] = y.astype(o_ref.dtype)

    return kernel


def padded_matmul(a, b, *, scale=None, shift=None, relu=False,
                  tm, tn, tk, out_dtype=jnp.bfloat16):
    """out = maybe_relu((a @ b) [* scale] [+ shift]).

    a: (Mp, Kp), b: (Kp, Np) already padded; Mp % tm == Kp % tk == Np % tn == 0.
    scale/shift (optional): (1, Np) f32 row vectors, broadcast over rows.
    """
    Mp, Kp = a.shape
    Kp2, Np = b.shape
    assert Kp == Kp2, "inner dimensions must match"
    assert Mp % tm == 0 and Kp % tk == 0 and Np % tn == 0, "operands not padded to tiles"

    has_scale = scale is not None
    has_shift = shift is not None
    acc_in_out = jnp.dtype(out_dtype) == jnp.dtype(jnp.float32)

    in_specs = [
        pl.BlockSpec((tm, tk), lambda i, j, k: (i, k)),
        pl.BlockSpec((tk, tn), lambda i, j, k: (k, j)),
    ]
    operands = [a, b]
    if has_scale:
        in_specs.append(pl.BlockSpec((1, tn), lambda i, j, k: (0, j)))
        operands.append(scale)
    if has_shift:
        in_specs.append(pl.BlockSpec((1, tn), lambda i, j, k: (0, j)))
        operands.append(shift)

    scratch_shapes = [] if acc_in_out else [pltpu.VMEM((tm, tn), jnp.float32)]

    grid = (Mp // tm, Np // tn, Kp // tk)

    return pl.pallas_call(
        _make_mm_kernel(has_scale, has_shift, relu, acc_in_out),
        out_shape=jax.ShapeDtypeStruct((Mp, Np), out_dtype),
        grid_spec=pltpu.PrefetchScalarGridSpec(
            num_scalar_prefetch=0,
            grid=grid,
            in_specs=in_specs,
            out_specs=pl.BlockSpec((tm, tn), lambda i, j, k: (i, j)),
            scratch_shapes=scratch_shapes,
        ),
        compiler_params=pltpu.CompilerParams(
            dimension_semantics=("parallel", "parallel", "arbitrary"),
            vmem_limit_bytes=_vmem_limit_bytes(),
        ),
    )(*operands)


# ---------------------------------------------------------------------------
# GCN pieces
# ---------------------------------------------------------------------------
def gcn_norm_dense_adj(edge_index, num_nodes, edge_weight=None,
                       dtype=jnp.float32):
    """Dense D^{-1/2} (A + I) D^{-1/2} (PyG gcn_norm with add_self_loops)."""
    # TODO(synk): the data-dependent scatter-add building the adjacency has no
    # clean BlockSpec equivalent, so it runs in plain JAX; the heavy matmuls
    # (aggregation / projection) run in Pallas.  For truly sparse graphs a
    # CSR-blocked PrefetchScalarGridSpec aggregation would replace this.
    src, dst = edge_index[0], edge_index[1]
    if edge_weight is None:
        edge_weight = jnp.ones(src.shape, dtype)
    adj = jnp.zeros((num_nodes, num_nodes), dtype).at[dst, src].add(
        edge_weight.astype(dtype))
    adj = adj + jnp.eye(num_nodes, dtype=dtype)  # self loops, weight 1
    deg = adj.sum(axis=1)
    d_inv_sqrt = jnp.where(deg > 0, jax.lax.rsqrt(deg), 0.0)
    return adj * d_inv_sqrt[:, None] * d_inv_sqrt[None, :]


def gcn_forward(x, edge_index, params, edge_weight=None, bn_eps=1e-5):
    """Inference forward of the GCN module (dropout == identity in eval)."""
    num_nodes, in_dim = x.shape
    num_layers = len(params["convs"])
    num_classes = params["convs"][-1]["weight"].shape[0]

    # ---- plan node tiling once -------------------------------------------
    P = _round_up(num_nodes, 128)              # padded node count (lane-aligned)
    tm = _pick_tile(P, 256, 8)                 # row tile (M) of both matmuls
    if tm == P and tm >= 16:                   # keep >= 2 parallel M blocks
        tm //= 2                               # (dual-TensorCore chips)
    tk_nodes = _pick_tile(P, 2048, 128)        # K tile of the aggregation matmul

    # ---- build + pad + cast the dense normalized adjacency ONCE -----------
    a_hat = gcn_norm_dense_adj(edge_index, num_nodes, edge_weight)
    a_hat_bf16 = jnp.pad(a_hat, ((0, P - num_nodes),
                                 (0, P - num_nodes))).astype(jnp.bfloat16)
    # TODO(synk): on v5e/v6e an int8-quantized A_hat (fp8-e4m3 on v7x) with the
    # dequant scale folded into the epilogue would further quarter this stream;
    # bf16 is the portable choice used here.

    # ---- node features: pad once, keep h padded (and bf16) across layers --
    fin_p = _round_up(in_dim, 128)
    h = jnp.pad(x.astype(jnp.float32),
                ((0, P - num_nodes), (0, fin_p - in_dim))).astype(jnp.bfloat16)

    for i, conv in enumerate(params["convs"]):
        w, b = conv["weight"], conv["bias"]    # w: (out_dim, in_dim)
        out_dim, w_in_dim = w.shape
        fin_p = h.shape[1]
        fout_p = _round_up(out_dim, 128)
        last = (i == num_layers - 1)

        # --- projection: h @ W^T (bf16 x bf16, f32 accumulation) -----------
        wt_p = jnp.pad(w.T.astype(jnp.float32),
                       ((0, fin_p - w_in_dim),
                        (0, fout_p - out_dim))).astype(jnp.bfloat16)
        tn_f = _pick_tile(fout_p, 512, 128)
        tk_f = _pick_tile(fin_p, 2048, 128)
        h = padded_matmul(h, wt_p, tm=tm, tn=tn_f, tk=tk_f,
                          out_dtype=jnp.bfloat16)

        # --- aggregation: A_hat @ h, epilogue fuses bias (+ BN + ReLU) -----
        if not last:
            bn = params["norms"][i]
            s = bn["weight"] * jax.lax.rsqrt(bn["running_var"] + bn_eps)
            scale = jnp.pad(s.astype(jnp.float32),
                            (0, fout_p - out_dim)).reshape(1, fout_p)
            shift = jnp.pad((b * s + bn["bias"] - bn["running_mean"] * s
                             ).astype(jnp.float32),
                            (0, fout_p - out_dim)).reshape(1, fout_p)
            h = padded_matmul(a_hat_bf16, h, scale=scale, shift=shift,
                              relu=True, tm=tm, tn=tn_f, tk=tk_nodes,
                              out_dtype=jnp.bfloat16)
        else:
            shift = jnp.pad(b.astype(jnp.float32),
                            (0, fout_p - out_dim)).reshape(1, fout_p)
            h = padded_matmul(a_hat_bf16, h, shift=shift, relu=False,
                              tm=tm, tn=tn_f, tk=tk_nodes,
                              out_dtype=jnp.float32)

    return h[:num_nodes, :num_classes]


def gcn_forward_ref(x, edge_index, params, edge_weight=None, bn_eps=1e-5):
    """Plain-JAX f32 reference with identical semantics."""
    num_nodes = x.shape[0]
    a_hat = gcn_norm_dense_adj(edge_index, num_nodes, edge_weight)
    num_layers = len(params["convs"])
    h = x.astype(jnp.float32)
    for i, conv in enumerate(params["convs"]):
        w, b = conv["weight"], conv["bias"]
        h = a_hat @ (h @ w.T) + b
        if i != num_layers - 1:
            bn = params["norms"][i]
            h = (h - bn["running_mean"]) * jax.lax.rsqrt(
                bn["running_var"] + bn_eps) * bn["weight"] + bn["bias"]
            h = jnp.maximum(h, 0.0)
    return h


# ---------------------------------------------------------------------------
# Demo / correctness check
# ---------------------------------------------------------------------------
if __name__ == "__main__":
    key = jax.random.PRNGKey(0)

    num_nodes, num_edges = 32, 64
    num_layers, input_dim, hidden, num_classes = 3, 48, 64, 8

    keys = jax.random.split(key, 16)
    x = jax.random.normal(keys[0], (num_nodes, input_dim), dtype=jnp.float32)
    src = jax.random.randint(keys[1], (num_edges,), 0, num_nodes)
    dst = jax.random.randint(keys[2], (num_edges,), 0, num_nodes)
    edge_index = jnp.stack([src, dst]).astype(jnp.int32)

    dims = [input_dim] + [hidden] * (num_layers - 1) + [num_classes]
    convs, norms = [], []
    for i in range(num_layers):
        fan_in, fan_out = dims[i], dims[i + 1]
        w_key, b_key, g_key, v_key = jax.random.split(keys[3 + i], 4)
        scale = 1.0 / jnp.sqrt(jnp.float32(fan_in))
        convs.append({
            "weight": scale * jax.random.normal(w_key, (fan_out, fan_in),
                                                dtype=jnp.float32),
            "bias": 0.1 * jax.random.normal(b_key, (fan_out,),
                                            dtype=jnp.float32),
        })
        if i != num_layers - 1:
            norms.append({
                "weight": 1.0 + 0.1 * jax.random.normal(g_key, (fan_out,),
                                                        dtype=jnp.float32),
                "bias": 0.05 * jax.random.normal(v_key, (fan_out,),
                                                 dtype=jnp.float32),
                "running_mean": 0.02 * jax.random.normal(keys[8 + i],
                                                         (fan_out,),
                                                         dtype=jnp.float32),
                "running_var": 1.0 + 0.1 * jax.random.uniform(
                    keys[11 + i], (fan_out,), dtype=jnp.float32),
            })
    params = {"convs": convs, "norms": norms}

    y = gcn_forward(x, edge_index, params)
    y = jax.block_until_ready(y)

    ref = gcn_forward_ref(x, edge_index, params)
    assert y.shape == (num_nodes, num_classes)
    # bf16 MXU operands (f32 accumulation) -> compare against the f32 reference
    # with a bf16-appropriate, magnitude-normalized tolerance.
    max_err = float(jnp.max(jnp.abs(y - ref)))
    ref_scale = float(jnp.max(jnp.abs(ref))) + 1e-6
    assert max_err / ref_scale < 0.08, (
        f"mismatch vs reference: rel err {max_err / ref_scale:.4f}")

    print("KERNEL_OK")
</pallas_src>

<mosaic_0001>
module attributes {stable_mosaic.version = 11 : i64} {
  func.func @kernel(%arg0: i32, %arg1: i32, %arg2: i32, %arg3: memref<64x128xbf16, #tpu.memory_space<vmem>>, %arg4: memref<128x128xbf16, #tpu.memory_space<vmem>>, %arg5: memref<64x128xbf16, #tpu.memory_space<vmem>>, %arg6: memref<64x128xf32, #tpu.memory_space<vmem>>) attributes {dimension_semantics = [#tpu.dimension_semantics<parallel>, #tpu.dimension_semantics<parallel>, #tpu.dimension_semantics<arbitrary>], iteration_bounds = array<i64: 2, 1, 1>, scalar_prefetch = 0 : i64, scratch_operands = 1 : i64, tpu.core_type = #tpu.core_type<tc>, window_params = [{transform_indices = @transform_0, window_bounds = array<i64: 64, 128>}, {transform_indices = @transform_1, window_bounds = array<i64: 128, 128>}, {transform_indices = @transform_2, window_bounds = array<i64: 64, 128>}]} {
    %c0 = arith.constant 0 : index
    %c0_0 = arith.constant 0 : index
    %0 = vector.load %arg3[%c0, %c0_0] : memref<64x128xbf16, #tpu.memory_space<vmem>>, vector<64x128xbf16>
    %c0_1 = arith.constant 0 : index
    %c0_2 = arith.constant 0 : index
    %1 = vector.load %arg4[%c0_1, %c0_2] : memref<128x128xbf16, #tpu.memory_space<vmem>>, vector<128x128xbf16>
    %cst = arith.constant dense<0.000000e+00> : vector<64x128xf32>
    %2 = tpu.matmul %0, %1, %cst {dimension_numbers = #tpu.dot_dimension_numbers<[1], [0], [0], [1], [0, 0, 1, 1], [], []>} : vector<64x128xbf16>, vector<128x128xbf16>, vector<64x128xf32> -> vector<64x128xf32>
    %c0_i32 = arith.constant 0 : i32
    %3 = arith.cmpi eq, %arg2, %c0_i32 : i32
    %4 = arith.extui %3 : i1 to i32
    %c0_i32_3 = arith.constant 0 : i32
    %5 = arith.cmpi ne, %4, %c0_i32_3 : i32
    scf.if %5 {
      %c0_8 = arith.constant 0 : index
      %c0_9 = arith.constant 0 : index
      %12 = vector.load %arg6[%c0_8, %c0_9] : memref<64x128xf32, #tpu.memory_space<vmem>>, vector<64x128xf32>
      tpu.vector_store %arg6[%c0_8, %c0_9], %2 {strides = array<i32>} : memref<64x128xf32, #tpu.memory_space<vmem>>, vector<64x128xf32>,
    } else {
    }
    %c0_i32_4 = arith.constant 0 : i32
    %6 = arith.cmpi sgt, %arg2, %c0_i32_4 : i32
    %7 = arith.extui %6 : i1 to i32
    %c0_i32_5 = arith.constant 0 : i32
    %8 = arith.cmpi ne, %7, %c0_i32_5 : i32
    scf.if %8 {
      %c0_8 = arith.constant 0 : index
      %c0_9 = arith.constant 0 : index
      %12 = vector.load %arg6[%c0_8, %c0_9] : memref<64x128xf32, #tpu.memory_space<vmem>>, vector<64x128xf32>
      %13 = arith.addf %12, %2 : vector<64x128xf32>
      %c0_10 = arith.constant 0 : index
      %c0_11 = arith.constant 0 : index
      %14 = vector.load %arg6[%c0_10, %c0_11] : memref<64x128xf32, #tpu.memory_space<vmem>>, vector<64x128xf32>
      tpu.vector_store %arg6[%c0_10, %c0_11], %13 {strides = array<i32>} : memref<64x128xf32, #tpu.memory_space<vmem>>, vector<64x128xf32>,
    } else {
    }
    %c0_i32_6 = arith.constant 0 : i32
    %9 = arith.cmpi eq, %arg2, %c0_i32_6 : i32
    %10 = arith.extui %9 : i1 to i32
    %c0_i32_7 = arith.constant 0 : i32
    %11 = arith.cmpi ne, %10, %c0_i32_7 : i32
    scf.if %11 {
      %c0_8 = arith.constant 0 : index
      %c0_9 = arith.constant 0 : index
      %12 = vector.load %arg6[%c0_8, %c0_9] : memref<64x128xf32, #tpu.memory_space<vmem>>, vector<64x128xf32>
      %13 = arith.truncf %12 : vector<64x128xf32> to vector<64x128xbf16>
      %c0_10 = arith.constant 0 : index
      %c0_11 = arith.constant 0 : index
      %14 = vector.load %arg5[%c0_10, %c0_11] : memref<64x128xbf16, #tpu.memory_space<vmem>>, vector<64x128xbf16>
      tpu.vector_store %arg5[%c0_10, %c0_11], %13 {strides = array<i32>} : memref<64x128xbf16, #tpu.memory_space<vmem>>, vector<64x128xbf16>,
    } else {
    }
    return
  }
  func.func @transform_0(%arg0: i32, %arg1: i32, %arg2: i32) -> (i32, i32) {
    %c0_i32 = arith.constant 0 : i32
    return %arg0, %arg2 : i32, i32
  }
  func.func @transform_1(%arg0: i32, %arg1: i32, %arg2: i32) -> (i32, i32) {
    %c0_i32 = arith.constant 0 : i32
    return %arg2, %arg1 : i32, i32
  }
  func.func @transform_2(%arg0: i32, %arg1: i32, %arg2: i32) -> (i32, i32) {
    %c0_i32 = arith.constant 0 : i32
    return %arg0, %arg1 : i32, i32
  }
}

</mosaic_0001>

<llo_original>
// kernel: tpu_custom_call.1
$region0: #{tpu_custom_call.1}
  #allocation0 [shape = 'u32[]', space=smem, size = 0x4, offset = 0x4, fixed_abs, tag = 'smem constant byte address 0x4 - core index']
  #allocation1 [shape = 'u32[144,128]{1,0:T(1,128)}', space=vmem, size = 0x12000, scoped, tag = 'internal scratch']
  #allocation2 [shape = 'f32[64,128]{1,0:T(8,128)}', space=vmem, size = 0x8000, scoped, tag = 'scratch operand']
  %s0 = inlined_call_operand.hbm [shape: bf16[128,128], index: 0, kind: input, shape index: {}]
  %s1 = inlined_call_operand.hbm [shape: bf16[128,128], index: 1, kind: input, shape index: {}]
  %s2 = inlined_call_operand.hbm [shape: bf16[128,128], index: 2, kind: output, shape index: {}]
  %s3 = sld [smem:[#allocation0]]
  $region61: #{tpu_custom_call.1} parent=0
    _
  %s5 = ssub.s32 1, %s3
  %s6 = scalar_select 0, %s5, %s3
  $region1: #{tpu_custom_call.1} parent=0
    #allocation3 [shape = 'u8[32768]{0}', space=vmem, size = 0x8000, scoped, tag = 'input window, operand 0']
    #allocation4 [shape = 's32[2]{0}', space=sflag, size = 0x8, scoped, tag = 'scoped memory for tpu_custom_call.1']
    #allocation5 [shape = 's32[2]{0}', space=sflag, size = 0x8, scoped, tag = 'scoped memory for tpu_custom_call.1']
    #allocation6 [shape = 'u8[32768]{0}', space=vmem, size = 0x8000, scoped, tag = 'input window, operand 1, single buffered']
    #allocation7 [shape = 's32[1]{0}', space=sflag, size = 0x4, scoped, tag = 'scoped memory for tpu_custom_call.1']
    #allocation8 [shape = 'u8[32768]{0}', space=vmem, size = 0x8000, scoped, tag = 'output window, operand 0']
    %7 = vsyncpa [#allocation4], 0
    %s8 = scalar_lea.sflag [#allocation4], 1
    %9 = vsyncpa %s8, 0
    %10 = vsyncpa [#allocation7], 0
    %11 = vsyncpa [#allocation5], 0
    %s12 = scalar_lea.sflag [#allocation5], 1
    %13 = vsyncpa %s12, 0
    loop: start=0, step=1, limit=4
    $region2: #{tpu_custom_call.1} parent=1 // loop_pre_header
      _
    $region3: #{tpu_custom_call.1} parent=1 // loop_header
      %s15 = sphi 0, %s19
      %p16 = scmp.ge.s32.totalorder %s15, 4
      %s22 = sphi 0, %s41
      %s23 = sphi 0, %s37
      %s24 = sphi 0, %s33
      %s25 = sphi 0, %s22
      %s26 = sphi 0, %s23
      %s27 = sphi 0, %s24
      %s28 = sphi 0, %s25
      %s29 = sphi 0, %s26
      %s30 = sphi 0, %s27
      %s46 = sphi 0, %s48
      %s49 = sphi 0, %s46
      %s50 = sphi 0, %s49
      %s66 = sphi 0, %s50
      %s74 = sphi 0, %s76
      %s77 = sphi 0, %s74
      %s78 = sphi 0, %s77
      %s94 = sphi 0, %s78
      %s102 = sphi 0, %s104
      %s105 = sphi 0, %s102
      %s106 = sphi 0, %s105
      %s122 = sphi 0, %s106
    $region4: #{tpu_custom_call.1} parent=1 // loop_header_branch
      %18 = sbr.rel (%p16) target = $region8
    $region5: #{tpu_custom_call.1} parent=1 // loop_body
      %s20 = ssub.s32 %s15, 1
      %s21 = ssub.s32 %s15, 2
      %s31 = sadd.s32 1, %s24
      %p32 = scmp.ge.s32.totalorder %s31, 1
      %s33 = scalar_select %p32, 0, %s31
      %s34 = sadd.s32 1, %s23
      %s35 = scalar_select %p32, %s34, %s23
      %p36 = scmp.ge.s32.totalorder %s35, 1
      %s37 = scalar_select %p36, 0, %s35
      %s38 = sadd.s32 1, %s22
      %s39 = scalar_select %p36, %s38, %s22
      %p40 = scmp.ge.s32.totalorder %s39, 2
      %s41 = scalar_select %p40, 0, %s39
      %s42 = ssub.s32 %s22, %s41
      %s43 = ssub.s32 %s24, %s33
      %s44 = sor.u32 %s42, %s43
      %p45 = scmp.eq.s32.totalorder %s44, 0
      %s47 = sadd.s32 %s46, 1
      %s48 = scalar_select %p45, %s46, %s47
      %p51 = pneg %p45
      %p52 = scmp.eq.s32.totalorder %s15, 1
      %p53 = por %p51, %p52
      %p54 = scmp.ne.s32.totalorder %s46, %s49
      %p55 = scmp.eq.s32.totalorder %s15, 0
      %p56 = por %p54, %p55
      %p57 = scmp.ne.s32.totalorder %s46, %s49
      %p58 = scmp.eq.s32.totalorder %s20, 1
      %p59 = por %p57, %p58
      %p60 = scmp.ne.s32.totalorder %s49, %s50
      %p61 = scmp.eq.s32.totalorder %s20, 0
      %p62 = por %p60, %p61
      %p63 = scmp.ne.s32.totalorder %s49, %s50
      %p64 = scmp.eq.s32.totalorder %s21, 1
      %p65 = por %p63, %p64
      %p67 = scmp.ne.s32.totalorder %s50, %s66
      %p68 = scmp.eq.s32.totalorder %s21, 0
      %p69 = por %p67, %p68
      %s70 = ssub.s32 %s24, %s33
      %s71 = ssub.s32 %s23, %s37
      %s72 = sor.u32 %s70, %s71
      %p73 = scmp.eq.s32.totalorder %s72, 0
      %s75 = sadd.s32 %s74, 1
      %s76 = scalar_select %p73, %s74, %s75
      %p79 = pneg %p73
      %p80 = scmp.eq.s32.totalorder %s15, 1
      %p81 = por %p79, %p80
      %p82 = scmp.ne.s32.totalorder %s74, %s77
      %p83 = scmp.eq.s32.totalorder %s15, 0
      %p84 = por %p82, %p83
      %p85 = scmp.ne.s32.totalorder %s74, %s77
      %p86 = scmp.eq.s32.totalorder %s20, 1
      %p87 = por %p85, %p86
      %p88 = scmp.ne.s32.totalorder %s77, %s78
      %p89 = scmp.eq.s32.totalorder %s20, 0
      %p90 = por %p88, %p89
      %p91 = scmp.ne.s32.totalorder %s77, %s78
      %p92 = scmp.eq.s32.totalorder %s21, 1
      %p93 = por %p91, %p92
      %p95 = scmp.ne.s32.totalorder %s78, %s94
      %p96 = scmp.eq.s32.totalorder %s21, 0
      %p97 = por %p95, %p96
      %s98 = ssub.s32 %s22, %s41
      %s99 = ssub.s32 %s23, %s37
      %s100 = sor.u32 %s98, %s99
      %p101 = scmp.eq.s32.totalorder %s100, 0
      %s103 = sadd.s32 %s102, 1
      %s104 = scalar_select %p101, %s102, %s103
      %p107 = pneg %p101
      %p108 = scmp.eq.s32.totalorder %s15, 1
      %p109 = por %p107, %p108
      %p110 = scmp.ne.s32.totalorder %s102, %s105
      %p111 = scmp.eq.s32.totalorder %s15, 0
      %p112 = por %p110, %p111
      %p113 = scmp.ne.s32.totalorder %s102, %s105
      %p114 = scmp.eq.s32.totalorder %s20, 1
      %p115 = por %p113, %p114
      %p116 = scmp.ne.s32.totalorder %s105, %s106
      %p117 = scmp.eq.s32.totalorder %s20, 0
      %p118 = por %p116, %p117
      %p119 = scmp.ne.s32.totalorder %s105, %s106
      %p120 = scmp.eq.s32.totalorder %s21, 1
      %p121 = por %p119, %p120
      %p123 = scmp.ne.s32.totalorder %s106, %s122
      %p124 = scmp.eq.s32.totalorder %s21, 0
      %p125 = por %p123, %p124
      %p126 = scmp.le.s32.totalorder 1, %s15
      %p127 = scmp.lt.s32.totalorder %s15, 3
      %p128 = pnand %p126, %p127
      %p129 = pneg %p128
      // Predicated region
      $region9: #{tpu_custom_call.1} parent=5 // pred_check
        _
      $region10: #{tpu_custom_call.1} parent=5 // pred_check_branch
        %131 = sbr.rel (%p128) target = $region12
      $region11: #{tpu_custom_call.1} parent=5 // pred_region
        %s132 = ssub.s32 %s15, 1
        // Predicated region
        $region13: #{tpu_custom_call.1} parent=11 // pred_check
          %p133 = pneg %p90
        $region14: #{tpu_custom_call.1} parent=11 // pred_check_branch
          %135 = sbr.rel (%p133) target = $region16
        $region15: #{tpu_custom_call.1} parent=11 // pred_region
          %s136 = smul.u32 16, %s27
          %s138 = ssub.s32 1024, 1024
          %139 = vsyncadd [#allocation7], %s138
          %s140 = sadd.s32 %s26, %s136
          %s141 = smul.addr %s140, 64
          %s142 = scalar_lea.hbm %s1, %s141
          %s143 = sshll.u32 [#allocation6], 4
          %s144 = int_to_ptr.vmem [resolvable:$true] %s143
          %149 = dma.hbm_to_vmem [thread:$0]  %s142, 1024, %s144, [#allocation7], 64, 64, 4
        $region16: #{tpu_custom_call.1} parent=11 // pred_fallthru
          _
      $region12: #{tpu_custom_call.1} parent=5 // pred_fallthru
        _
      %p150 = scmp.lt.s32.totalorder %s15, 2
      // Predicated region
      $region17: #{tpu_custom_call.1} parent=5 // pred_check
        %p151 = pneg %p150
      $region18: #{tpu_custom_call.1} parent=5 // pred_check_branch
        %153 = sbr.rel (%p151) target = $region20
      $region19: #{tpu_custom_call.1} parent=5 // pred_region
        // Predicated region
        $region21: #{tpu_custom_call.1} parent=19 // pred_check
          %p154 = pneg %p56
        $region22: #{tpu_custom_call.1} parent=19 // pred_check_branch
          %156 = sbr.rel (%p154) target = $region24
        $region23: #{tpu_custom_call.1} parent=19 // pred_region
          %s157 = sand.u32 %s46, 1
          %s158 = scalar_lea.sflag [#allocation4], %s157
          %s159 = sand.u32 %s46, 1
          %s160 = smul.addr %s159, 32
          %s161 = scalar_lea.vmem [#allocation3], %s160
          %s162 = smul.u32 8, %s22
          %s164 = ssub.s32 512, 512
          %165 = vsyncadd %s158, %s164
          %s166 = sadd.s32 %s24, %s162
          %s167 = smul.addr %s166, 64
          %s168 = scalar_lea.hbm %s0, %s167
          %s169 = sshll.u32 %s161, 4
          %s170 = int_to_ptr.vmem [resolvable:$true] %s169
          %175 = dma.hbm_to_vmem [thread:$0]  %s168, 512, %s170, %s158, 64, 64, 4
        $region24: #{tpu_custom_call.1} parent=19 // pred_fallthru
          _
      $region20: #{tpu_custom_call.1} parent=5 // pred_fallthru
        _
      %p176 = scmp.le.s32.totalorder 1, %s15
      %p177 = scmp.lt.s32.totalorder %s15, 3
      %p178 = pnand %p176, %p177
      %p179 = pneg %p178
      // Predicated region
      $region25: #{tpu_custom_call.1} parent=5 // pred_check
        _
      $region26: #{tpu_custom_call.1} parent=5 // pred_check_branch
        %181 = sbr.rel (%p178) target = $region28
      $region27: #{tpu_custom_call.1} parent=5 // pred_region
        %s182 = ssub.s32 %s15, 1
        %s183 = sand.u32 %s49, 1
        %s184 = scalar_lea.sflag [#allocation4], %s183
        %s185 = sand.u32 %s49, 1
        %s186 = smul.addr %s185, 32
        %s187 = scalar_lea.vmem [#allocation3], %s186
        // Predicated region
        $region29: #{tpu_custom_call.1} parent=27 // pred_check
          %p188 = pneg %p62
        $region30: #{tpu_custom_call.1} parent=27 // pred_check_branch
          %190 = sbr.rel (%p188) target = $region32
        $region31: #{tpu_custom_call.1} parent=27 // pred_region
          %191 = dma.done %s184, 512
        $region32: #{tpu_custom_call.1} parent=27 // pred_fallthru
          _
        // Predicated region
        $region33: #{tpu_custom_call.1} parent=27 // pred_check
          %p192 = pneg %p90
        $region34: #{tpu_custom_call.1} parent=27 // pred_check_branch
          %194 = sbr.rel (%p192) target = $region36
        $region35: #{tpu_custom_call.1} parent=27 // pred_region
          %195 = dma.done [#allocation7], 1024
        $region36: #{tpu_custom_call.1} parent=27 // pred_fallthru
          _
        %s196 = sand.u32 %s49, 1
        %s197 = scalar_lea.sflag [#allocation4], %s196
        %s198 = sand.u32 %s49, 1
        %s199 = smul.addr %s198, 32
        %s200 = scalar_lea.vmem [#allocation3], %s199
        %p201 = pneg %p62
        %p202 = pneg %p59
        %p203 = pneg %p90
        %p204 = pneg %p87
        %p205 = pneg %p118
        %p206 = pneg %p115
        %s207 = sand.u32 %s105, 1
        %s208 = scalar_lea.sflag [#allocation5], %s207
        %s209 = sand.u32 %s105, 1
        %s210 = smul.addr %s209, 32
        %s211 = scalar_lea.vmem [#allocation8], %s210
        %s212 = smul.u32 8, %s25
        %s213 = smul.u32 16, %s27
        %s214 = smul.u32 8, %s25
        %v216 = vld [vmem:[%s187] sm:$0xf]
        %v217 = vld [vmem:[%s187 + $0x4] sm:$0xf]
        %v218 = vld [vmem:[%s187 + $0x8] sm:$0xf]
        %v219 = vld [vmem:[%s187 + $0xc] sm:$0xf]
        %v220 = vld [vmem:[%s187 + $0x10] sm:$0xf]
        %v221 = vld [vmem:[%s187 + $0x14] sm:$0xf]
        %v222 = vld [vmem:[%s187 + $0x18] sm:$0xf]
        %v223 = vld [vmem:[%s187 + $0x1c] sm:$0xf]
        %v224 = vld [vmem:[#allocation6] sm:$0xf]
        %v225 = vld [vmem:[#allocation6 + $0x4] sm:$0xf]
        %v226 = vld [vmem:[#allocation6 + $0x8] sm:$0xf]
        %v227 = vld [vmem:[#allocation6 + $0xc] sm:$0xf]
        %v228 = vld [vmem:[#allocation6 + $0x10] sm:$0xf]
        %v229 = vld [vmem:[#allocation6 + $0x14] sm:$0xf]
        %v230 = vld [vmem:[#allocation6 + $0x18] sm:$0xf]
        %v231 = vld [vmem:[#allocation6 + $0x1c] sm:$0xf]
        %v232 = vld [vmem:[#allocation6 + $0x20] sm:$0xf]
        %v233 = vld [vmem:[#allocation6 + $0x24] sm:$0xf]
        %v234 = vld [vmem:[#allocation6 + $0x28] sm:$0xf]
        %v235 = vld [vmem:[#allocation6 + $0x2c] sm:$0xf]
        %v236 = vld [vmem:[#allocation6 + $0x30] sm:$0xf]
        %v237 = vld [vmem:[#allocation6 + $0x34] sm:$0xf]
        %v238 = vld [vmem:[#allocation6 + $0x38] sm:$0xf]
        %v239 = vld [vmem:[#allocation6 + $0x3c] sm:$0xf]
        %v248 = vunpack.c.l.b16 %v216
        %v249 = vunpack.c.l.b16 %v217
        %v250 = vunpack.c.l.b16 %v218
        %v251 = vunpack.c.l.b16 %v219
        %v252 = vunpack.c.l.b16 %v220
        %v253 = vunpack.c.l.b16 %v221
        %v254 = vunpack.c.l.b16 %v222
        %v255 = vunpack.c.l.b16 %v223
        %v256 = vpack.c.b16 %v249, %v248
        %v257 = vpack.c.b16 %v251, %v250
        %v258 = vpack.c.b16 %v253, %v252
        %v259 = vpack.c.b16 %v255, %v254
        %v280 = vunpack.c.l.b16 %v224
        %v281 = vunpack.c.l.b16 %v225
        %v282 = vunpack.c.l.b16 %v226
        %v283 = vunpack.c.l.b16 %v227
        %v284 = vunpack.c.l.b16 %v228
        %v285 = vunpack.c.l.b16 %v229
        %v286 = vunpack.c.l.b16 %v230
        %v287 = vunpack.c.l.b16 %v231
        %v288 = vunpack.c.l.b16 %v232
        %v289 = vunpack.c.l.b16 %v233
        %v290 = vunpack.c.l.b16 %v234
        %v291 = vunpack.c.l.b16 %v235
        %v292 = vunpack.c.l.b16 %v236
        %v293 = vunpack.c.l.b16 %v237
        %v294 = vunpack.c.l.b16 %v238
        %v295 = vunpack.c.l.b16 %v239
        %v296 = vpack.c.b16 %v281, %v280
        %v297 = vpack.c.b16 %v283, %v282
        %v298 = vpack.c.b16 %v285, %v284
        %v299 = vpack.c.b16 %v287, %v286
        %v300 = vpack.c.b16 %v289, %v288
        %v301 = vpack.c.b16 %v291, %v290
        %v302 = vpack.c.b16 %v293, %v292
        %v303 = vpack.c.b16 %v295, %v294
        %312 = vmatprep.subr.bf16.mxu0 0
        %313 = vmatpush1.bf16.msra.mxu0 %v296
        %314 = vmatprep.subr.bf16.mxu0 0
        %315 = vmatpush1.bf16.msra.mxu0 %v297
        %316 = vmatprep.subr.bf16.mxu0 0
        %317 = vmatpush1.bf16.msra.mxu0 %v298
        %318 = vmatprep.subr.bf16.mxu0 0
        %319 = vmatpush1.bf16.msra.mxu0 %v299
        %320 = vmatprep.subr.bf16.mxu0 0
        %321 = vmatpush1.bf16.msra.mxu0 %v300
        %322 = vmatprep.subr.bf16.mxu0 0
        %323 = vmatpush1.bf16.msra.mxu0 %v301
        %324 = vmatprep.subr.bf16.mxu0 0
        %325 = vmatpush1.bf16.msra.mxu0 %v302
        %326 = vmatprep.subr.bf16.mxu0 0
        %327 = vmatpush1.bf16.msra.mxu0 %v303
        %328 = vmatprep.subr.bf16.mxu0 0
        %329 = vmatpush1.bf16.msra.mxu0 0
        %330 = vmatprep.subr.bf16.mxu0 0
        %331 = vmatpush1.bf16.msra.mxu0 0
        %332 = vmatprep.subr.bf16.mxu0 0
        %333 = vmatpush1.bf16.msra.mxu0 0
        %334 = vmatprep.subr.bf16.mxu0 0
        %335 = vmatpush1.bf16.msra.mxu0 0
        %336 = vmatprep.subr.bf16.mxu0 0
        %337 = vmatpush1.bf16.msra.mxu0 0
        %338 = vmatprep.subr.bf16.mxu0 0
        %339 = vmatpush1.bf16.msra.mxu0 0
        %340 = vmatprep.subr.bf16.mxu0 0
        %341 = vmatpush1.bf16.msra.mxu0 0
        %342 = vmatprep.subr.bf16.mxu0 0
        %343 = vmatpush1.bf16.msra.mxu0 0
        %344 = vmatprep.mubr.bf16.mxu0 0
        %345 = vmatmul.mubr.bf16.gmra.mrb[0].mxu0 %v256
        %v346 = vpop.f32.mrb[0].mxu0
        %v347 = vadd.f32 0.0, %v346
        %v348 = vpop.f32.mrb[0].mxu0
        %v349 = vpop.f32.mrb[0].mxu0
        %v350 = vadd.f32 0.0, %v349
        %v351 = vpop.f32.mrb[0].mxu0
        %352 = vmatprep.mubr.bf16.mxu0 0
        %353 = vmatmul.mubr.bf16.gmra.mrb[0].mxu0 %v257
        %v354 = vpop.f32.mrb[0].mxu0
        %v355 = vadd.f32 0.0, %v354
        %v356 = vpop.f32.mrb[0].mxu0
        %v357 = vpop.f32.mrb[0].mxu0
        %v358 = vadd.f32 0.0, %v357
        %v359 = vpop.f32.mrb[0].mxu0
        %360 = vmatprep.mubr.bf16.mxu0 0
        %361 = vmatmul.mubr.bf16.gmra.mrb[0].mxu0 %v258
        %v362 = vpop.f32.mrb[0].mxu0
        %v363 = vadd.f32 0.0, %v362
        %v364 = vpop.f32.mrb[0].mxu0
        %v365 = vpop.f32.mrb[0].mxu0
        %v366 = vadd.f32 0.0, %v365
        %v367 = vpop.f32.mrb[0].mxu0
        %368 = vmatprep.mubr.bf16.mxu0 0
        %369 = vmatmul.mubr.bf16.gmra.mrb[0].mxu0 %v259
        %v370 = vpop.f32.mrb[0].mxu0
        %v371 = vadd.f32 0.0, %v370
        %v372 = vpop.f32.mrb[0].mxu0
        %v373 = vpop.f32.mrb[0].mxu0
        %v374 = vadd.f32 0.0, %v373
        %v375 = vpop.f32.mrb[0].mxu0
        %376 = vdwg.mxu0
        %p377 = scmp.eq.s32.totalorder %s27, 0
        // Predicated region
        $region37: #{tpu_custom_call.1} parent=27 // pred_check
          %p378 = pneg %p377
        $region38: #{tpu_custom_call.1} parent=27 // pred_check_branch
          %380 = sbr.rel (%p378) target = $region40
        $region39: #{tpu_custom_call.1} parent=27 // pred_region
          %381 = vst [vmem:[#allocation2] sm:$0xff] %v347
          %382 = vst [vmem:[#allocation2 + $0x8] sm:$0xff] %v350
          %383 = vst [vmem:[#allocation2 + $0x10] sm:$0xff] %v355
          %384 = vst [vmem:[#allocation2 + $0x18] sm:$0xff] %v358
          %385 = vst [vmem:[#allocation2 + $0x20] sm:$0xff] %v363
          %386 = vst [vmem:[#allocation2 + $0x28] sm:$0xff] %v366
          %387 = vst [vmem:[#allocation2 + $0x30] sm:$0xff] %v371
          %388 = vst [vmem:[#allocation2 + $0x38] sm:$0xff] %v374
        $region40: #{tpu_custom_call.1} parent=27 // pred_fallthru
          _
        %p389 = scmp.gt.s32.totalorder %s27, 0
        // Predicated region
        $region41: #{tpu_custom_call.1} parent=27 // pred_check
          %p390 = pneg %p389
        $region42: #{tpu_custom_call.1} parent=27 // pred_check_branch
          %392 = sbr.rel (%p390) target = $region44
        $region43: #{tpu_custom_call.1} parent=27 // pred_region
          %v393 = vld [vmem:[#allocation2] sm:$0xff]
          %v394 = vld [vmem:[#allocation2 + $0x8] sm:$0xff]
          %v395 = vld [vmem:[#allocation2 + $0x10] sm:$0xff]
          %v396 = vld [vmem:[#allocation2 + $0x18] sm:$0xff]
          %v397 = vld [vmem:[#allocation2 + $0x20] sm:$0xff]
          %v398 = vld [vmem:[#allocation2 + $0x28] sm:$0xff]
          %v399 = vld [vmem:[#allocation2 + $0x30] sm:$0xff]
          %v400 = vld [vmem:[#allocation2 + $0x38] sm:$0xff]
          %v401 = vadd.f32 %v393, %v347
          %v402 = vadd.f32 %v394, %v350
          %v403 = vadd.f32 %v395, %v355
          %v404 = vadd.f32 %v396, %v358
          %v405 = vadd.f32 %v397, %v363
          %v406 = vadd.f32 %v398, %v366
          %v407 = vadd.f32 %v399, %v371
          %v408 = vadd.f32 %v400, %v374
          %409 = vst [vmem:[#allocation2] sm:$0xff] %v401
          %410 = vst [vmem:[#allocation2 + $0x8] sm:$0xff] %v402
          %411 = vst [vmem:[#allocation2 + $0x10] sm:$0xff] %v403
          %412 = vst [vmem:[#allocation2 + $0x18] sm:$0xff] %v404
          %413 = vst [vmem:[#allocation2 + $0x20] sm:$0xff] %v405
          %414 = vst [vmem:[#allocation2 + $0x28] sm:$0xff] %v406
          %415 = vst [vmem:[#allocation2 + $0x30] sm:$0xff] %v407
          %416 = vst [vmem:[#allocation2 + $0x38] sm:$0xff] %v408
        $region44: #{tpu_custom_call.1} parent=27 // pred_fallthru
          _
        // Predicated region
        $region45: #{tpu_custom_call.1} parent=27 // pred_check
          %p417 = pneg %p377
        $region46: #{tpu_custom_call.1} parent=27 // pred_check_branch
          %419 = sbr.rel (%p417) target = $region48
        $region47: #{tpu_custom_call.1} parent=27 // pred_region
          %v420 = vld [vmem:[#allocation2] sm:$0xff]
          %v421 = vld [vmem:[#allocation2 + $0x8] sm:$0xff]
          %v422 = vld [vmem:[#allocation2 + $0x10] sm:$0xff]
          %v423 = vld [vmem:[#allocation2 + $0x18] sm:$0xff]
          %v424 = vld [vmem:[#allocation2 + $0x20] sm:$0xff]
          %v425 = vld [vmem:[#allocation2 + $0x28] sm:$0xff]
          %v426 = vld [vmem:[#allocation2 + $0x30] sm:$0xff]
          %v427 = vld [vmem:[#allocation2 + $0x38] sm:$0xff]
          %v428 = vpack.c.bf16 %v421, %v420
          %v429 = vpack.c.bf16 %v423, %v422
          %v430 = vpack.c.bf16 %v425, %v424
          %v431 = vpack.c.bf16 %v427, %v426
          %v436 = vunpack.c.l.b16 %v428
          %v437 = vunpack.c.h.b16 %v428
          %v438 = vunpack.c.l.b16 %v429
          %v439 = vunpack.c.h.b16 %v429
          %v440 = vunpack.c.l.b16 %v430
          %v441 = vunpack.c.h.b16 %v430
          %v442 = vunpack.c.l.b16 %v431
          %v443 = vunpack.c.h.b16 %v431
          %v444 = vpack.c.b16 %v436, %v436
          %v445 = vpack.c.b16 %v437, %v437
          %v446 = vpack.c.b16 %v438, %v438
          %v447 = vpack.c.b16 %v439, %v439
          %v448 = vpack.c.b16 %v440, %v440
          %v449 = vpack.c.b16 %v441, %v441
          %v450 = vpack.c.b16 %v442, %v442
          %v451 = vpack.c.b16 %v443, %v443
          %460 = vst [vmem:[%s211] sm:$0xf] %v444
          %461 = vst [vmem:[%s211 + $0x4] sm:$0xf] %v445
          %462 = vst [vmem:[%s211 + $0x8] sm:$0xf] %v446
          %463 = vst [vmem:[%s211 + $0xc] sm:$0xf] %v447
          %464 = vst [vmem:[%s211 + $0x10] sm:$0xf] %v448
          %465 = vst [vmem:[%s211 + $0x14] sm:$0xf] %v449
          %466 = vst [vmem:[%s211 + $0x18] sm:$0xf] %v450
          %467 = vst [vmem:[%s211 + $0x1c] sm:$0xf] %v451
        $region48: #{tpu_custom_call.1} parent=27 // pred_fallthru
          _
        %s468 = sand.u32 %s105, 1
        %s469 = scalar_lea.sflag [#allocation5], %s468
        %s470 = sand.u32 %s105, 1
        %s471 = smul.addr %s470, 32
        %s472 = scalar_lea.vmem [#allocation8], %s471
        // Predicated region
        $region49: #{tpu_custom_call.1} parent=27 // pred_check
          %p473 = pneg %p115
        $region50: #{tpu_custom_call.1} parent=27 // pred_check_branch
          %475 = sbr.rel (%p473) target = $region52
        $region51: #{tpu_custom_call.1} parent=27 // pred_region
          %s476 = smul.u32 8, %s25
          %s478 = ssub.s32 512, 512
          %479 = vsyncadd %s469, %s478
          %s480 = sadd.s32 %s26, %s476
          %s481 = smul.addr %s480, 64
          %s482 = scalar_lea.hbm %s2, %s481
          %s483 = sshll.u32 %s472, 4
          %s484 = int_to_ptr.vmem [resolvable:$true] %s483
          %489 = dma.vmem_to_hbm [thread:$0]  %s484, 512, %s482, %s469, 64, 64, 4
        $region52: #{tpu_custom_call.1} parent=27 // pred_fallthru
          _
      $region28: #{tpu_custom_call.1} parent=5 // pred_fallthru
        _
      %p490 = scmp.le.s32.totalorder 2, %s15
      // Predicated region
      $region53: #{tpu_custom_call.1} parent=5 // pred_check
        %p491 = pneg %p490
      $region54: #{tpu_custom_call.1} parent=5 // pred_check_branch
        %493 = sbr.rel (%p491) target = $region56
      $region55: #{tpu_custom_call.1} parent=5 // pred_region
        %s494 = ssub.s32 %s15, 2
        // Predicated region
        $region57: #{tpu_custom_call.1} parent=55 // pred_check
          %p495 = pneg %p121
        $region58: #{tpu_custom_call.1} parent=55 // pred_check_branch
          %497 = sbr.rel (%p495) target = $region60
        $region59: #{tpu_custom_call.1} parent=55 // pred_region
          %s498 = sand.u32 %s106, 1
          %s499 = scalar_lea.sflag [#allocation5], %s498
          %s500 = sand.u32 %s106, 1
          %s501 = smul.addr %s500, 32
          %s502 = scalar_lea.vmem [#allocation8], %s501
          %503 = dma.done %s499, 512
        $region60: #{tpu_custom_call.1} parent=55 // pred_fallthru
          _
      $region56: #{tpu_custom_call.1} parent=5 // pred_fallthru
        _
    $region6: #{tpu_custom_call.1} parent=1 // loop_footer
      %s19 = sadd.s32 1, %s15
    $region7: #{tpu_custom_call.1} parent=1 // loop_footer_branch
      %14 = sbr.rel target = $region3
    $region8: #{tpu_custom_call.1} parent=1 // loop_exit
      _
    %504 = vsyncpa [#allocation4], 1
    %s505 = scalar_lea.sflag [#allocation4], 1
    %506 = vsyncpa %s505, 1
    %507 = vsyncpa [#allocation7], 1
    %508 = vsyncpa [#allocation5], 1
    %s509 = scalar_lea.sflag [#allocation5], 1
    %510 = vsyncpa %s509, 1

</llo_original>
